<compile_context>
chip_gen: v7x
topology: tpu7x:2x2x1
jax: 0.10.0
libtpu: 0.0.40
codegen_flags: <defaults>
</compile_context>

<pallas_src>
import jax
import jax.numpy as jnp
from jax.experimental import pallas as pl
from jax.experimental.pallas import tpu as pltpu


def _round_up(x, m):
    return ((x + m - 1) // m) * m


# --------------------------- kernels ---------------------------------------

def _classblock_kernel_single_k(x_ref, w_ref, b_ref, o_ref):
    """y = leaky_relu(x) @ W + b with the whole K in one tile (no accumulator)."""
    x = x_ref[...]
    # LeakyReLU(0.1) in f32 on the VPU; Dropout(p=0.5) is identity in eval mode.
    x = jnp.where(x >= 0, x, jnp.float32(0.1) * x)
    acc = jnp.dot(x.astype(w_ref.dtype), w_ref[...],
                  preferred_element_type=jnp.float32)
    o_ref[...] = (acc + b_ref[...]).astype(o_ref.dtype)


def _classblock_kernel_multi_k(x_ref, w_ref, b_ref, o_ref, acc_ref):
    """One (TM, TN, TK) grid step of y = leaky_relu(x) @ W + b (K innermost)."""
    k = pl.program_id(2)

    @pl.when(k == 0)
    def _():
        acc_ref[...] = jnp.zeros_like(acc_ref)

    x = x_ref[...]
    x = jnp.where(x >= 0, x, jnp.float32(0.1) * x)
    acc_ref[...] += jnp.dot(x.astype(w_ref.dtype), w_ref[...],
                            preferred_element_type=jnp.float32)

    @pl.when(k == pl.num_programs(2) - 1)
    def _():
        o_ref[...] = (acc_ref[...] + b_ref[...]).astype(o_ref.dtype)


# --------------------------- wrapper ----------------------------------------

def class_block_forward(x, weight_kn, bias, *, tm=None, tn=512, tk=None,
                        matmul_dtype=jnp.bfloat16,
                        vmem_budget_bytes=40 * 1024 * 1024):
    """ClassBlock forward (eval mode).

    x:         (B, D) float32
    weight_kn: (D, C) float32 -- (input_dim, class_num) "matmul" layout.
               A PyTorch nn.Linear weight of shape (C, D) converts via `.T`
               once at init (no per-call transpose).
    bias:      (C,)   float32
    Returns (B, C) logits in x.dtype.
    """
    B, D = x.shape
    D_w, C = weight_kn.shape
    assert D == D_w, "weight_kn must be (input_dim, class_num)"
    out_dtype = x.dtype

    if matmul_dtype is not None and weight_kn.dtype != matmul_dtype:
        weight_kn = weight_kn.astype(matmul_dtype)  # bf16 halves W HBM bytes
    w_itemsize = jnp.dtype(weight_kn.dtype).itemsize
    x_itemsize = jnp.dtype(x.dtype).itemsize
    o_itemsize = jnp.dtype(out_dtype).itemsize

    # ---- tile selection (last-two block dims must be (8,128)-aligned) ------
    # M: keep the whole (padded) batch in one tile when it fits, so the weight
    #    matrix (dominant HBM byte count) streams exactly once.
    Bp8 = _round_up(B, 8)
    if tm is None:
        tm = Bp8 if Bp8 <= 512 else 256
    tm = _round_up(min(tm, Bp8), 8)

    # K: whole (padded) D in one tile up to 2048 -> single-K fast path.
    Dp128 = _round_up(D, 128)
    if tk is None:
        tk = Dp128 if Dp128 <= 2048 else 2048
    tk = _round_up(min(tk, Dp128), 128)

    # N: lane-dense, large by default.
    tn = _round_up(min(tn, _round_up(C, 128)), 128)

    Bp = _round_up(B, tm)
    n_i = Bp // tm

    # v7x has 2 TensorCores: prefer an even number of parallel (i, j) tiles.
    n_j = -(-C // tn)
    if (n_i * n_j) % 2 == 1 and tn > 128:
        tn_half = max(128, ((tn // 2) // 128) * 128)
        if (n_i * (-(-C // tn_half))) % 2 == 0:
            tn = tn_half

    # Keep the (double-buffered) footprint under the VMEM budget.
    def footprint(tm_, tn_, tk_):
        return (2 * tm_ * tk_ * x_itemsize      # x tile
                + 2 * tk_ * tn_ * w_itemsize    # W tile
                + 2 * tm_ * tn_ * o_itemsize    # out tile
                + 2 * tn_ * 4                   # bias tile
                + tm_ * tn_ * 4)                # f32 accumulator

    while footprint(tm, tn, tk) > vmem_budget_bytes and tk > 512:
        tk = _round_up(tk // 2, 128)

    Dp = _round_up(D, tk)
    Cp = _round_up(C, tn)
    n_i, n_j, n_k = Bp // tm, Cp // tn, Dp // tk

    # ---- zero-pad to tile multiples (zeros are inert: leaky_relu(0)=0,
    #      padded W rows/bias cols are 0; padded rows/cols sliced off below).
    if (Bp, Dp) != (B, D):
        x = jnp.pad(x, ((0, Bp - B), (0, Dp - D)))
    if (Dp, Cp) != (D, C):
        weight_kn = jnp.pad(weight_kn, ((0, Dp - D), (0, Cp - C)))
    b2d = jnp.pad(bias.astype(jnp.float32), (0, Cp - C)).reshape(1, Cp)

    vmem_limit = min(max(32 * 1024 * 1024,
                         int(1.5 * footprint(tm, tn, tk)) + (8 << 20)),
                     48 * 1024 * 1024)
    cost = pl.CostEstimate(
        flops=2 * B * D * C,
        transcendentals=0,
        bytes_accessed=int(n_j * Bp * Dp * x_itemsize     # x re-streamed per j
                           + n_i * Dp * Cp * w_itemsize   # W re-streamed per i
                           + Bp * Cp * o_itemsize
                           + Cp * 4))

    if n_k == 1:
        # Single-K fast path: no accumulator, no reduction grid axis.
        out = pl.pallas_call(
            _classblock_kernel_single_k,
            out_shape=jax.ShapeDtypeStruct((Bp, Cp), out_dtype),
            grid_spec=pltpu.PrefetchScalarGridSpec(
                num_scalar_prefetch=0,
                grid=(n_i, n_j),
                in_specs=[
                    pl.BlockSpec((tm, Dp), lambda i, j: (i, 0)),   # x
                    pl.BlockSpec((Dp, tn), lambda i, j: (0, j)),   # W (K, N)
                    pl.BlockSpec((1, tn), lambda i, j: (0, j)),    # bias
                ],
                out_specs=pl.BlockSpec((tm, tn), lambda i, j: (i, j)),
            ),
            compiler_params=pltpu.CompilerParams(
                dimension_semantics=("parallel", "parallel"),
                vmem_limit_bytes=vmem_limit),
            cost_estimate=cost,
        )(x, weight_kn, b2d)
    else:
        out = pl.pallas_call(
            _classblock_kernel_multi_k,
            out_shape=jax.ShapeDtypeStruct((Bp, Cp), out_dtype),
            grid_spec=pltpu.PrefetchScalarGridSpec(
                num_scalar_prefetch=0,
                grid=(n_i, n_j, n_k),
                in_specs=[
                    pl.BlockSpec((tm, tk), lambda i, j, k: (i, k)),   # x
                    pl.BlockSpec((tk, tn), lambda i, j, k: (k, j)),   # W (K, N)
                    pl.BlockSpec((1, tn), lambda i, j, k: (0, j)),    # bias
                ],
                out_specs=pl.BlockSpec((tm, tn), lambda i, j, k: (i, j)),
                scratch_shapes=[pltpu.VMEM((tm, tn), jnp.float32)],
            ),
            compiler_params=pltpu.CompilerParams(
                dimension_semantics=("parallel", "parallel", "arbitrary"),
                vmem_limit_bytes=vmem_limit),
            cost_estimate=cost,
        )(x, weight_kn, b2d)

    if (Bp, Cp) != (B, C):
        out = out[:B, :C]
    return out


def init_classblock_params(key, input_dim, class_num):
    """weights_init_classifier1: Linear weight ~ N(0, 0.001), bias = 0.

    Weight is returned in (input_dim, class_num) == (K, N) layout so the MXU
    operand never needs a transpose (one-time layout choice at init; a PyTorch
    (class_num, input_dim) weight converts via `weight.T`)."""
    w_key, _ = jax.random.split(key)
    weight_kn = 0.001 * jax.random.normal(w_key, (input_dim, class_num),
                                          dtype=jnp.float32)
    bias = jnp.zeros((class_num,), dtype=jnp.float32)
    return weight_kn, bias


def _reference(x, weight_kn, bias):
    xr = jnp.where(x >= 0, x, 0.1 * x)
    return xr @ weight_kn + bias


if __name__ == "__main__":
    key = jax.random.PRNGKey(0)

    # --- small demo shapes (single-K fast path, bf16 MXU default) ---
    B, input_dim, class_num = 8, 32, 16
    k1, k2, k3 = jax.random.split(key, 3)
    x = jax.random.normal(k1, (B, input_dim), dtype=jnp.float32)
    weight_kn, bias = init_classblock_params(k2, input_dim, class_num)

    out = class_block_forward(x, weight_kn, bias)
    jax.block_until_ready(out)
    ref = _reference(x, weight_kn, bias)
    assert out.shape == (B, class_num)
    assert jnp.allclose(out, ref, atol=2e-3, rtol=2e-2), "bf16 path mismatch"

    # f32 MXU path should match tightly.
    out_f32 = class_block_forward(x, weight_kn, bias, matmul_dtype=None)
    jax.block_until_ready(out_f32)
    assert jnp.allclose(out_f32, ref, atol=1e-4, rtol=1e-3), "f32 path mismatch"

    # --- multi-tile N + multi-K accumulator path (force small tk/tn) ---
    B2, D2, C2 = 16, 384, 640
    k4, k5 = jax.random.split(k3)
    x2 = jax.random.normal(k4, (B2, D2), dtype=jnp.float32)
    w2, b2 = init_classblock_params(k5, D2, C2)

    out2 = class_block_forward(x2, w2, b2, tn=256, tk=128)
    jax.block_until_ready(out2)
    ref2 = _reference(x2, w2, b2)
    assert out2.shape == (B2, C2)
    assert jnp.allclose(out2, ref2, atol=5e-3, rtol=2e-2), "multi-K path mismatch"

    print("KERNEL_OK")
</pallas_src>

<mosaic_0001>
module attributes {stable_mosaic.version = 11 : i64} {
  func.func @_classblock_kernel_single_k(%arg0: i32, %arg1: i32, %arg2: memref<8x128xf32, #tpu.memory_space<vmem>>, %arg3: memref<128x128xbf16, #tpu.memory_space<vmem>>, %arg4: memref<1x128xf32, #tpu.memory_space<vmem>>, %arg5: memref<8x128xf32, #tpu.memory_space<vmem>>) attributes {dimension_semantics = [#tpu.dimension_semantics<parallel>, #tpu.dimension_semantics<parallel>], iteration_bounds = array<i64: 1, 1>, scalar_prefetch = 0 : i64, scratch_operands = 0 : i64, tpu.core_type = #tpu.core_type<tc>, window_params = [{transform_indices = @transform_0, window_bounds = array<i64: 8, 128>}, {transform_indices = @transform_1, window_bounds = array<i64: 128, 128>}, {transform_indices = @transform_2, window_bounds = array<i64: 1, 128>}, {transform_indices = @transform_3, window_bounds = array<i64: 8, 128>}]} {
    %c0 = arith.constant 0 : index
    %c0_0 = arith.constant 0 : index
    %0 = vector.load %arg2[%c0, %c0_0] : memref<8x128xf32, #tpu.memory_space<vmem>>, vector<8x128xf32>
    %cst = arith.constant 0.000000e+00 : f32
    %1 = vector.broadcast %cst : f32 to vector<8x128xf32>
    %2 = arith.cmpf oge, %0, %1 : vector<8x128xf32>
    %cst_1 = arith.constant 1.000000e-01 : f32
    %3 = vector.broadcast %cst_1 : f32 to vector<8x128xf32>
    %4 = arith.mulf %3, %0 : vector<8x128xf32>
    %5 = arith.select %2, %0, %4 : vector<8x128xi1>, vector<8x128xf32>
    %6 = arith.truncf %5 : vector<8x128xf32> to vector<8x128xbf16>
    %c0_2 = arith.constant 0 : index
    %c0_3 = arith.constant 0 : index
    %7 = vector.load %arg3[%c0_2, %c0_3] : memref<128x128xbf16, #tpu.memory_space<vmem>>, vector<128x128xbf16>
    %cst_4 = arith.constant dense<0.000000e+00> : vector<8x128xf32>
    %8 = tpu.matmul %6, %7, %cst_4 {dimension_numbers = #tpu.dot_dimension_numbers<[1], [0], [0], [1], [0, 0, 1, 1], [], []>} : vector<8x128xbf16>, vector<128x128xbf16>, vector<8x128xf32> -> vector<8x128xf32>
    %c0_5 = arith.constant 0 : index
    %c0_6 = arith.constant 0 : index
    %9 = vector.load %arg4[%c0_5, %c0_6] : memref<1x128xf32, #tpu.memory_space<vmem>>, vector<1x128xf32>
    %10 = vector.broadcast %9 : vector<1x128xf32> to vector<8x128xf32>
    %11 = arith.addf %8, %10 : vector<8x128xf32>
    %c0_7 = arith.constant 0 : index
    %c0_8 = arith.constant 0 : index
    %12 = vector.load %arg5[%c0_7, %c0_8] : memref<8x128xf32, #tpu.memory_space<vmem>>, vector<8x128xf32>
    tpu.vector_store %arg5[%c0_7, %c0_8], %11 {strides = array<i32>} : memref<8x128xf32, #tpu.memory_space<vmem>>, vector<8x128xf32>,
    return
  }
  func.func @transform_0(%arg0: i32, %arg1: i32) -> (i32, i32) {
    %c0_i32 = arith.constant 0 : i32
    %c0_i32_0 = arith.constant 0 : i32
    return %arg0, %c0_i32 : i32, i32
  }
  func.func @transform_1(%arg0: i32, %arg1: i32) -> (i32, i32) {
    %c0_i32 = arith.constant 0 : i32
    %c0_i32_0 = arith.constant 0 : i32
    return %c0_i32, %arg1 : i32, i32
  }
  func.func @transform_2(%arg0: i32, %arg1: i32) -> (i32, i32) {
    %c0_i32 = arith.constant 0 : i32
    %c0_i32_0 = arith.constant 0 : i32
    return %c0_i32, %arg1 : i32, i32
  }
  func.func @transform_3(%arg0: i32, %arg1: i32) -> (i32, i32) {
    %c0_i32 = arith.constant 0 : i32
    return %arg0, %arg1 : i32, i32
  }
}

</mosaic_0001>

<llo_original>
// kernel: tpu_custom_call.1
$region0: #{tpu_custom_call.1}
  #allocation0 [shape = 'u32[]', space=smem, size = 0x4, offset = 0x4, fixed_abs, tag = 'smem constant byte address 0x4 - core index']
  #allocation1 [shape = 'u32[144,128]{1,0:T(1,128)}', space=vmem, size = 0x12000, scoped, tag = 'internal scratch']
  %s0 = inlined_call_operand.hbm [shape: f32[8,128], index: 0, kind: input, shape index: {}]
  %s1 = inlined_call_operand.hbm [shape: bf16[128,128], index: 1, kind: input, shape index: {}]
  %s2 = inlined_call_operand.vmem [shape: f32[1,128], index: 2, kind: input, shape index: {}]
  %s3 = inlined_call_operand.hbm [shape: f32[8,128], index: 3, kind: output, shape index: {}]
  %s4 = sld [smem:[#allocation0]]
  $region30: #{tpu_custom_call.1} parent=0
    _
  %s6 = ssub.s32 1, %s4
  %s7 = scalar_select 0, %s6, %s4
  $region1: #{tpu_custom_call.1} parent=0
    #allocation2 [shape = 'u8[4096]{0}', space=vmem, size = 0x1000, scoped, tag = 'input window, operand 0, single buffered']
    #allocation3 [shape = 's32[1]{0}', space=sflag, size = 0x4, scoped, tag = 'scoped memory for tpu_custom_call.1']
    #allocation4 [shape = 's32[1]{0}', space=sflag, size = 0x4, scoped, tag = 'scoped memory for tpu_custom_call.1']
    #allocation5 [shape = 'u8[32768]{0}', space=vmem, size = 0x8000, scoped, tag = 'input window, operand 1, single buffered']
    #allocation6 [shape = 's32[1]{0}', space=sflag, size = 0x4, scoped, tag = 'scoped memory for tpu_custom_call.1']
    #allocation7 [shape = 'u8[4096]{0}', space=vmem, size = 0x1000, scoped, tag = 'output window, operand 0, single buffered']
    %8 = vsyncpa [#allocation3], 0
    %9 = vsyncpa [#allocation6], 0
    %10 = vsyncpa [#allocation4], 0
    // Predicated region
    $region2: #{tpu_custom_call.1} parent=1 // pred_check
      _
    $region3: #{tpu_custom_call.1} parent=1 // pred_check_branch
      %12 = sbr.rel (0) target = $region5
    $region4: #{tpu_custom_call.1} parent=1 // pred_region
      %s14 = ssub.s32 128, 128
      %15 = vsyncadd [#allocation3], %s14
      %s17 = sshll.u32 [#allocation2], 4
      %s18 = int_to_ptr.vmem [resolvable:$true] %s17
      %20 = dma.hbm_to_vmem [thread:$0]  %s0, 128, %s18, [#allocation3]
    $region5: #{tpu_custom_call.1} parent=1 // pred_fallthru
      _
    // Predicated region
    $region6: #{tpu_custom_call.1} parent=1 // pred_check
      _
    $region7: #{tpu_custom_call.1} parent=1 // pred_check_branch
      %22 = sbr.rel (0) target = $region9
    $region8: #{tpu_custom_call.1} parent=1 // pred_region
      %s24 = ssub.s32 1024, 1024
      %25 = vsyncadd [#allocation6], %s24
      %s26 = sshll.u32 [#allocation5], 4
      %s27 = int_to_ptr.vmem [resolvable:$true] %s26
      %32 = dma.hbm_to_vmem [thread:$0]  %s1, 1024, %s27, [#allocation6], 64, 64, 4
    $region9: #{tpu_custom_call.1} parent=1 // pred_fallthru
      _
    // Predicated region
    $region10: #{tpu_custom_call.1} parent=1 // pred_check
      _
    $region11: #{tpu_custom_call.1} parent=1 // pred_check_branch
      %34 = sbr.rel (0) target = $region13
    $region12: #{tpu_custom_call.1} parent=1 // pred_region
      _
    $region13: #{tpu_custom_call.1} parent=1 // pred_fallthru
      _
    // Predicated region
    $region14: #{tpu_custom_call.1} parent=1 // pred_check
      _
    $region15: #{tpu_custom_call.1} parent=1 // pred_check_branch
      %36 = sbr.rel (0) target = $region17
    $region16: #{tpu_custom_call.1} parent=1 // pred_region
      %37 = dma.done [#allocation3], 128
    $region17: #{tpu_custom_call.1} parent=1 // pred_fallthru
      _
    // Predicated region
    $region18: #{tpu_custom_call.1} parent=1 // pred_check
      _
    $region19: #{tpu_custom_call.1} parent=1 // pred_check_branch
      %39 = sbr.rel (0) target = $region21
    $region20: #{tpu_custom_call.1} parent=1 // pred_region
      %40 = dma.done [#allocation6], 1024
    $region21: #{tpu_custom_call.1} parent=1 // pred_fallthru
      _
    %v42 = vld [vmem:[#allocation2] sm:$0xff]
    %vm43 = vcmp.ge.f32.partialorder %v42, 0.0
    %v44 = vmul.f32 %v42, 0.1
    %v45 = vsel %vm43, %v42, %v44
    %v46 = vpack.c.bf16 %v45, %v45
    %v47 = vld [vmem:[#allocation5] sm:$0xf]
    %v48 = vld [vmem:[#allocation5 + $0x4] sm:$0xf]
    %v49 = vld [vmem:[#allocation5 + $0x8] sm:$0xf]
    %v50 = vld [vmem:[#allocation5 + $0xc] sm:$0xf]
    %v51 = vld [vmem:[#allocation5 + $0x10] sm:$0xf]
    %v52 = vld [vmem:[#allocation5 + $0x14] sm:$0xf]
    %v53 = vld [vmem:[#allocation5 + $0x18] sm:$0xf]
    %v54 = vld [vmem:[#allocation5 + $0x1c] sm:$0xf]
    %v55 = vld [vmem:[#allocation5 + $0x20] sm:$0xf]
    %v56 = vld [vmem:[#allocation5 + $0x24] sm:$0xf]
    %v57 = vld [vmem:[#allocation5 + $0x28] sm:$0xf]
    %v58 = vld [vmem:[#allocation5 + $0x2c] sm:$0xf]
    %v59 = vld [vmem:[#allocation5 + $0x30] sm:$0xf]
    %v60 = vld [vmem:[#allocation5 + $0x34] sm:$0xf]
    %v61 = vld [vmem:[#allocation5 + $0x38] sm:$0xf]
    %v62 = vld [vmem:[#allocation5 + $0x3c] sm:$0xf]
    %v63 = vld [vmem:[%s2] sm:$0x1]
    %v65 = vlaneseq
    %v66 = vshrl.u32 %v65, 7
    %v67 = vsub.s32 0, %v66
    %v68 = vrot.slane %v63, %v67
    %v86 = vunpack.c.l.b16 %v47
    %v87 = vunpack.c.l.b16 %v48
    %v88 = vunpack.c.l.b16 %v49
    %v89 = vunpack.c.l.b16 %v50
    %v90 = vunpack.c.l.b16 %v51
    %v91 = vunpack.c.l.b16 %v52
    %v92 = vunpack.c.l.b16 %v53
    %v93 = vunpack.c.l.b16 %v54
    %v94 = vunpack.c.l.b16 %v55
    %v95 = vunpack.c.l.b16 %v56
    %v96 = vunpack.c.l.b16 %v57
    %v97 = vunpack.c.l.b16 %v58
    %v98 = vunpack.c.l.b16 %v59
    %v99 = vunpack.c.l.b16 %v60
    %v100 = vunpack.c.l.b16 %v61
    %v101 = vunpack.c.l.b16 %v62
    %v102 = vpack.c.b16 %v87, %v86
    %v103 = vpack.c.b16 %v89, %v88
    %v104 = vpack.c.b16 %v91, %v90
    %v105 = vpack.c.b16 %v93, %v92
    %v106 = vpack.c.b16 %v95, %v94
    %v107 = vpack.c.b16 %v97, %v96
    %v108 = vpack.c.b16 %v99, %v98
    %v109 = vpack.c.b16 %v101, %v100
    %118 = vmatprep.subr.bf16.mxu0 0
    %119 = vmatpush1.bf16.msra.mxu0 %v102
    %120 = vmatprep.subr.bf16.mxu0 0
    %121 = vmatpush1.bf16.msra.mxu0 %v103
    %122 = vmatprep.subr.bf16.mxu0 0
    %123 = vmatpush1.bf16.msra.mxu0 %v104
    %124 = vmatprep.subr.bf16.mxu0 0
    %125 = vmatpush1.bf16.msra.mxu0 %v105
    %126 = vmatprep.subr.bf16.mxu0 0
    %127 = vmatpush1.bf16.msra.mxu0 %v106
    %128 = vmatprep.subr.bf16.mxu0 0
    %129 = vmatpush1.bf16.msra.mxu0 %v107
    %130 = vmatprep.subr.bf16.mxu0 0
    %131 = vmatpush1.bf16.msra.mxu0 %v108
    %132 = vmatprep.subr.bf16.mxu0 0
    %133 = vmatpush1.bf16.msra.mxu0 %v109
    %134 = vmatprep.subr.bf16.mxu0 0
    %135 = vmatpush1.bf16.msra.mxu0 0
    %136 = vmatprep.subr.bf16.mxu0 0
    %137 = vmatpush1.bf16.msra.mxu0 0
    %138 = vmatprep.subr.bf16.mxu0 0
    %139 = vmatpush1.bf16.msra.mxu0 0
    %140 = vmatprep.subr.bf16.mxu0 0
    %141 = vmatpush1.bf16.msra.mxu0 0
    %142 = vmatprep.subr.bf16.mxu0 0
    %143 = vmatpush1.bf16.msra.mxu0 0
    %144 = vmatprep.subr.bf16.mxu0 0
    %145 = vmatpush1.bf16.msra.mxu0 0
    %146 = vmatprep.subr.bf16.mxu0 0
    %147 = vmatpush1.bf16.msra.mxu0 0
    %148 = vmatprep.subr.bf16.mxu0 0
    %149 = vmatpush1.bf16.msra.mxu0 0
    %150 = vmatprep.mubr.bf16.mxu0 0
    %151 = vmatmul.mubr.bf16.gmra.mrb[0].mxu0 %v46
    %v152 = vpop.f32.mrb[0].mxu0
    %v153 = vadd.f32 %v68, %v152
    %v154 = vpop.f32.mrb[0].mxu0
    %v155 = vpop.f32.mrb[0].mxu0
    %v156 = vpop.f32.mrb[0].mxu0
    %157 = vdwg.mxu0
    %158 = vst [vmem:[#allocation7] sm:$0xff] %v153
    // Predicated region
    $region22: #{tpu_custom_call.1} parent=1 // pred_check
      _
    $region23: #{tpu_custom_call.1} parent=1 // pred_check_branch
      %160 = sbr.rel (0) target = $region25
    $region24: #{tpu_custom_call.1} parent=1 // pred_region
      %s162 = ssub.s32 128, 128
      %163 = vsyncadd [#allocation4], %s162
      %s165 = sshll.u32 [#allocation7], 4
      %s166 = int_to_ptr.vmem [resolvable:$true] %s165
      %168 = dma.vmem_to_hbm [thread:$0]  %s166, 128, %s3, [#allocation4]
    $region25: #{tpu_custom_call.1} parent=1 // pred_fallthru
      _
    // Predicated region
    $region26: #{tpu_custom_call.1} parent=1 // pred_check
      _
    $region27: #{tpu_custom_call.1} parent=1 // pred_check_branch
      %170 = sbr.rel (0) target = $region29
    $region28: #{tpu_custom_call.1} parent=1 // pred_region
      %171 = dma.done [#allocation4], 128
    $region29: #{tpu_custom_call.1} parent=1 // pred_fallthru
      _
    %172 = vsyncpa [#allocation3], 1
    %173 = vsyncpa [#allocation6], 1
    %174 = vsyncpa [#allocation4], 1

</llo_original>
